<compile_context>
chip_gen: v6e
topology: v6e:2x2x1
jax: 0.10.0
libtpu: 0.0.40
codegen_flags: <defaults>
</compile_context>

<pallas_src>
import functools

import jax
import jax.numpy as jnp
from jax.experimental import pallas as pl
from jax.experimental.pallas import tpu as pltpu

LANE = 128
SUBLANE = 8


def _round_up(x, m):
    return ((x + m - 1) // m) * m


def dqn_kernel(x_ref, w1_ref, b1_ref, w2_ref, b2_ref, w3_ref, b3_ref, o_ref):
    # All tiles are lane-dense (last dim = 128 multiple). Weights are resident
    # across grid steps; only x / out tiles stream per batch tile.
    x = x_ref[...]

    h1 = jnp.dot(x, w1_ref[...], preferred_element_type=jnp.float32) + b1_ref[...]
    h1 = jnp.maximum(h1, 0.0)

    h2 = jnp.dot(h1.astype(w2_ref.dtype), w2_ref[...],
                 preferred_element_type=jnp.float32) + b2_ref[...]
    h2 = jnp.maximum(h2, 0.0)

    out = jnp.dot(h2.astype(w3_ref.dtype), w3_ref[...],
                  preferred_element_type=jnp.float32) + b3_ref[...]
    o_ref[...] = out.astype(o_ref.dtype)


def prepare_params(params, *, compute_dtype=jnp.float32):
    """One-time glue: transpose PyTorch-style [out, in] weights to [in, out],
    zero-pad every feature dim to a multiple of 128, biases to (1, 128k) slabs.
    Do this once (e.g. when creating/updating the train state), not per call.
    Returns a dict whose array entries are passed to the jitted impl; the
    Python-int metadata ('dims') is consumed only by the non-jit wrapper."""
    w1, b1 = params["w1"], params["b1"]
    w2, b2 = params["w2"], params["b2"]
    w3, b3 = params["w3"], params["b3"]

    in_dim, hid, out_dim = w1.shape[1], w1.shape[0], w3.shape[0]
    in_p = _round_up(in_dim, LANE)
    hid_p = _round_up(hid, LANE)
    out_p = _round_up(out_dim, LANE)

    def pad_wt(w, rows_p, cols_p):
        wt = w.T.astype(compute_dtype)                    # [in, out]
        return jnp.zeros((rows_p, cols_p), compute_dtype).at[
            : wt.shape[0], : wt.shape[1]].set(wt)

    def pad_b(b, cols_p):
        return jnp.zeros((1, cols_p), jnp.float32).at[0, : b.shape[0]].set(
            b.astype(jnp.float32))

    return {
        "dims": (in_dim, hid, out_dim),                   # Python ints (wrapper only)
        "w1": pad_wt(w1, in_p, hid_p), "b1": pad_b(b1, hid_p),
        "w2": pad_wt(w2, hid_p, hid_p), "b2": pad_b(b2, hid_p),
        "w3": pad_wt(w3, hid_p, out_p), "b3": pad_b(b3, out_p),
    }


def _pick_block_b(batch):
    b8 = _round_up(batch, SUBLANE)
    # Target <=512 rows/step (amortizes ~0.35us/step, keeps VMEM tiny), but
    # keep >=2 grid steps when the batch allows so both TCs get work and the
    # DMA pipeline overlaps compute.
    block_b = min(512, b8)
    if b8 // block_b < 2 and b8 >= 2 * SUBLANE:
        block_b = _round_up(b8 // 2, SUBLANE)
    return block_b


@functools.partial(jax.jit, static_argnames=("in_dim", "out_dim", "block_b"))
def _dqn_forward_impl(x, w1, b1, w2, b2, w3, b3, *, in_dim, out_dim, block_b):
    """Array-only jitted impl. Static metadata comes in via static_argnames."""
    in_p, hid_p = w1.shape
    out_p = w3.shape[1]
    cdt = w1.dtype

    B = x.shape[0]
    b_pad = _round_up(B, block_b)

    # Pad batch (sublane) and feature (lane) dims with zeros; exact for the
    # kept rows/cols since padded weight rows/cols and biases are zero.
    xp = jnp.zeros((b_pad, in_p), cdt).at[:B, :in_dim].set(x.astype(cdt))

    grid = (b_pad // block_b,)

    out_padded = pl.pallas_call(
        dqn_kernel,
        out_shape=jax.ShapeDtypeStruct((b_pad, out_p), x.dtype),
        grid_spec=pltpu.PrefetchScalarGridSpec(
            num_scalar_prefetch=0,
            grid=grid,
            in_specs=[
                pl.BlockSpec((block_b, in_p), lambda i: (i, 0)),   # x tile (streams)
                pl.BlockSpec((in_p, hid_p), lambda i: (0, 0)),     # W1^T (resident)
                pl.BlockSpec((1, hid_p), lambda i: (0, 0)),        # b1
                pl.BlockSpec((hid_p, hid_p), lambda i: (0, 0)),    # W2^T
                pl.BlockSpec((1, hid_p), lambda i: (0, 0)),        # b2
                pl.BlockSpec((hid_p, out_p), lambda i: (0, 0)),    # W3^T
                pl.BlockSpec((1, out_p), lambda i: (0, 0)),        # b3
            ],
            out_specs=pl.BlockSpec((block_b, out_p), lambda i: (i, 0)),
        ),
        compiler_params=pltpu.CompilerParams(
            dimension_semantics=("parallel",),
            vmem_limit_bytes=32 * 1024 * 1024,  # safe on v5e/v6e/v7x; footprint ~2 MiB
        ),
    )(xp, w1, b1, w2, b2, w3, b3)

    return out_padded[:B, :out_dim]


def dqn_forward(x, prepared, *, block_b=None):
    """x: [B, input_size]. prepared: output of prepare_params(). Non-jit
    wrapper: unpacks Python metadata and forwards only arrays + static ints."""
    in_dim, _, out_dim = prepared["dims"]
    B = x.shape[0]
    if block_b is None:
        block_b = _pick_block_b(B)
    return _dqn_forward_impl(
        x, prepared["w1"], prepared["b1"], prepared["w2"], prepared["b2"],
        prepared["w3"], prepared["b3"],
        in_dim=in_dim, out_dim=out_dim, block_b=block_b)


def init_params(key, input_size, hidden_size, output_size):
    """PyTorch nn.Linear-style init (uniform +/- 1/sqrt(fan_in))."""
    ks = jax.random.split(key, 6)

    def linear_init(kw, kb, fan_in, fan_out):
        bound = 1.0 / jnp.sqrt(fan_in)
        w = jax.random.uniform(kw, (fan_out, fan_in), jnp.float32, -bound, bound)
        b = jax.random.uniform(kb, (fan_out,), jnp.float32, -bound, bound)
        return w, b

    w1, b1 = linear_init(ks[0], ks[1], input_size, hidden_size)
    w2, b2 = linear_init(ks[2], ks[3], hidden_size, hidden_size)
    w3, b3 = linear_init(ks[4], ks[5], hidden_size, output_size)
    return {"w1": w1, "b1": b1, "w2": w2, "b2": b2, "w3": w3, "b3": b3}


if __name__ == "__main__":
    # DQN-ish shapes: state=16, hidden=32, actions=4. Batch 256 so the grid has
    # >=2 parallel steps (128-row tiles) -> pipelining + megacore exercised.
    B, INPUT, HIDDEN, OUTPUT = 256, 16, 32, 4

    key = jax.random.PRNGKey(0)
    kx, kp = jax.random.split(key)
    x = jax.random.normal(kx, (B, INPUT), dtype=jnp.float32)
    params = init_params(kp, INPUT, HIDDEN, OUTPUT)

    # One-time weight layout prep (transpose + pad to lane-dense 128 slabs).
    # For large-batch throughput on v6e/v7x, pass compute_dtype=jnp.bfloat16.
    prepared = prepare_params(params, compute_dtype=jnp.float32)

    out = dqn_forward(x, prepared)
    out = jax.block_until_ready(out)

    # Pure-JAX reference of the same forward.
    h1 = jnp.maximum(x @ params["w1"].T + params["b1"], 0.0)
    h2 = jnp.maximum(h1 @ params["w2"].T + params["b2"], 0.0)
    ref = h2 @ params["w3"].T + params["b3"]

    assert out.shape == (B, OUTPUT)
    assert jnp.allclose(out, ref, atol=1e-5, rtol=1e-5), (
        float(jnp.max(jnp.abs(out - ref))))

    print("KERNEL_OK")
</pallas_src>

<mosaic_0001>
module attributes {stable_mosaic.version = 11 : i64} {
  func.func @dqn_kernel(%arg0: i32, %arg1: memref<128x128xf32, #tpu.memory_space<vmem>>, %arg2: memref<128x128xf32, #tpu.memory_space<vmem>>, %arg3: memref<1x128xf32, #tpu.memory_space<vmem>>, %arg4: memref<128x128xf32, #tpu.memory_space<vmem>>, %arg5: memref<1x128xf32, #tpu.memory_space<vmem>>, %arg6: memref<128x128xf32, #tpu.memory_space<vmem>>, %arg7: memref<1x128xf32, #tpu.memory_space<vmem>>, %arg8: memref<128x128xf32, #tpu.memory_space<vmem>>) attributes {dimension_semantics = [#tpu.dimension_semantics<parallel>], iteration_bounds = array<i64: 2>, scalar_prefetch = 0 : i64, scratch_operands = 0 : i64, tpu.core_type = #tpu.core_type<tc>, window_params = [{transform_indices = @transform_0, window_bounds = array<i64: 128, 128>}, {pipeline_mode = #tpu.pipeline_mode<synchronous>, transform_indices = @transform_1, window_bounds = array<i64: 128, 128>}, {pipeline_mode = #tpu.pipeline_mode<synchronous>, transform_indices = @transform_2, window_bounds = array<i64: 1, 128>}, {pipeline_mode = #tpu.pipeline_mode<synchronous>, transform_indices = @transform_3, window_bounds = array<i64: 128, 128>}, {pipeline_mode = #tpu.pipeline_mode<synchronous>, transform_indices = @transform_4, window_bounds = array<i64: 1, 128>}, {pipeline_mode = #tpu.pipeline_mode<synchronous>, transform_indices = @transform_5, window_bounds = array<i64: 128, 128>}, {pipeline_mode = #tpu.pipeline_mode<synchronous>, transform_indices = @transform_6, window_bounds = array<i64: 1, 128>}, {transform_indices = @transform_7, window_bounds = array<i64: 128, 128>}]} {
    %c0 = arith.constant 0 : index
    %c0_0 = arith.constant 0 : index
    %0 = vector.load %arg1[%c0, %c0_0] : memref<128x128xf32, #tpu.memory_space<vmem>>, vector<128x128xf32>
    %c0_1 = arith.constant 0 : index
    %c0_2 = arith.constant 0 : index
    %1 = vector.load %arg2[%c0_1, %c0_2] : memref<128x128xf32, #tpu.memory_space<vmem>>, vector<128x128xf32>
    %cst = arith.constant dense<0.000000e+00> : vector<128x128xf32>
    %2 = tpu.matmul %0, %1, %cst {dimension_numbers = #tpu.dot_dimension_numbers<[1], [0], [0], [1], [0, 0, 1, 1], [], []>} : vector<128x128xf32>, vector<128x128xf32>, vector<128x128xf32> -> vector<128x128xf32>
    %c0_3 = arith.constant 0 : index
    %c0_4 = arith.constant 0 : index
    %3 = vector.load %arg3[%c0_3, %c0_4] : memref<1x128xf32, #tpu.memory_space<vmem>>, vector<1x128xf32>
    %4 = vector.broadcast %3 : vector<1x128xf32> to vector<128x128xf32>
    %5 = arith.addf %2, %4 : vector<128x128xf32>
    %cst_5 = arith.constant 0.000000e+00 : f32
    %6 = vector.broadcast %cst_5 : f32 to vector<128x128xf32>
    %7 = arith.maximumf %5, %6 : vector<128x128xf32>
    %c0_6 = arith.constant 0 : index
    %c0_7 = arith.constant 0 : index
    %8 = vector.load %arg4[%c0_6, %c0_7] : memref<128x128xf32, #tpu.memory_space<vmem>>, vector<128x128xf32>
    %cst_8 = arith.constant dense<0.000000e+00> : vector<128x128xf32>
    %9 = tpu.matmul %7, %8, %cst_8 {dimension_numbers = #tpu.dot_dimension_numbers<[1], [0], [0], [1], [0, 0, 1, 1], [], []>} : vector<128x128xf32>, vector<128x128xf32>, vector<128x128xf32> -> vector<128x128xf32>
    %c0_9 = arith.constant 0 : index
    %c0_10 = arith.constant 0 : index
    %10 = vector.load %arg5[%c0_9, %c0_10] : memref<1x128xf32, #tpu.memory_space<vmem>>, vector<1x128xf32>
    %11 = vector.broadcast %10 : vector<1x128xf32> to vector<128x128xf32>
    %12 = arith.addf %9, %11 : vector<128x128xf32>
    %cst_11 = arith.constant 0.000000e+00 : f32
    %13 = vector.broadcast %cst_11 : f32 to vector<128x128xf32>
    %14 = arith.maximumf %12, %13 : vector<128x128xf32>
    %c0_12 = arith.constant 0 : index
    %c0_13 = arith.constant 0 : index
    %15 = vector.load %arg6[%c0_12, %c0_13] : memref<128x128xf32, #tpu.memory_space<vmem>>, vector<128x128xf32>
    %cst_14 = arith.constant dense<0.000000e+00> : vector<128x128xf32>
    %16 = tpu.matmul %14, %15, %cst_14 {dimension_numbers = #tpu.dot_dimension_numbers<[1], [0], [0], [1], [0, 0, 1, 1], [], []>} : vector<128x128xf32>, vector<128x128xf32>, vector<128x128xf32> -> vector<128x128xf32>
    %c0_15 = arith.constant 0 : index
    %c0_16 = arith.constant 0 : index
    %17 = vector.load %arg7[%c0_15, %c0_16] : memref<1x128xf32, #tpu.memory_space<vmem>>, vector<1x128xf32>
    %18 = vector.broadcast %17 : vector<1x128xf32> to vector<128x128xf32>
    %19 = arith.addf %16, %18 : vector<128x128xf32>
    %c0_17 = arith.constant 0 : index
    %c0_18 = arith.constant 0 : index
    %20 = vector.load %arg8[%c0_17, %c0_18] : memref<128x128xf32, #tpu.memory_space<vmem>>, vector<128x128xf32>
    tpu.vector_store %arg8[%c0_17, %c0_18], %19 {strides = array<i32>} : memref<128x128xf32, #tpu.memory_space<vmem>>, vector<128x128xf32>,
    return
  }
  func.func @transform_0(%arg0: i32) -> (i32, i32) {
    %c0_i32 = arith.constant 0 : i32
    %c0_i32_0 = arith.constant 0 : i32
    return %arg0, %c0_i32 : i32, i32
  }
  func.func @transform_1(%arg0: i32) -> (i32, i32) {
    %c0_i32 = arith.constant 0 : i32
    %c0_i32_0 = arith.constant 0 : i32
    %c0_i32_1 = arith.constant 0 : i32
    return %c0_i32, %c0_i32_0 : i32, i32
  }
  func.func @transform_2(%arg0: i32) -> (i32, i32) {
    %c0_i32 = arith.constant 0 : i32
    %c0_i32_0 = arith.constant 0 : i32
    %c0_i32_1 = arith.constant 0 : i32
    return %c0_i32, %c0_i32_0 : i32, i32
  }
  func.func @transform_3(%arg0: i32) -> (i32, i32) {
    %c0_i32 = arith.constant 0 : i32
    %c0_i32_0 = arith.constant 0 : i32
    %c0_i32_1 = arith.constant 0 : i32
    return %c0_i32, %c0_i32_0 : i32, i32
  }
  func.func @transform_4(%arg0: i32) -> (i32, i32) {
    %c0_i32 = arith.constant 0 : i32
    %c0_i32_0 = arith.constant 0 : i32
    %c0_i32_1 = arith.constant 0 : i32
    return %c0_i32, %c0_i32_0 : i32, i32
  }
  func.func @transform_5(%arg0: i32) -> (i32, i32) {
    %c0_i32 = arith.constant 0 : i32
    %c0_i32_0 = arith.constant 0 : i32
    %c0_i32_1 = arith.constant 0 : i32
    return %c0_i32, %c0_i32_0 : i32, i32
  }
  func.func @transform_6(%arg0: i32) -> (i32, i32) {
    %c0_i32 = arith.constant 0 : i32
    %c0_i32_0 = arith.constant 0 : i32
    %c0_i32_1 = arith.constant 0 : i32
    return %c0_i32, %c0_i32_0 : i32, i32
  }
  func.func @transform_7(%arg0: i32) -> (i32, i32) {
    %c0_i32 = arith.constant 0 : i32
    %c0_i32_0 = arith.constant 0 : i32
    return %arg0, %c0_i32 : i32, i32
  }
}

</mosaic_0001>

<llo_original>
// kernel: _dqn_forward_impl.1
$region0: #{_dqn_forward_impl.1}
  #allocation0 [shape = 'u32[]', space=smem, size = 0x4, offset = 0x4, fixed_abs, tag = 'smem constant byte address 0x4 - core index']
  #allocation1 [shape = 'u32[144,128]{1,0:T(1,128)}', space=vmem, size = 0x12000, scoped, tag = 'internal scratch']
  %s0 = inlined_call_operand.vmem [shape: f32[256,128], index: 0, kind: input, shape index: {}]
  %s1 = inlined_call_operand.vmem [shape: f32[128,128], index: 1, kind: input, shape index: {}]
  %s2 = inlined_call_operand.vmem [shape: f32[1,128], index: 2, kind: input, shape index: {}]
  %s3 = inlined_call_operand.vmem [shape: f32[128,128], index: 3, kind: input, shape index: {}]
  %s4 = inlined_call_operand.vmem [shape: f32[1,128], index: 4, kind: input, shape index: {}]
  %s5 = inlined_call_operand.vmem [shape: f32[128,128], index: 5, kind: input, shape index: {}]
  %s6 = inlined_call_operand.vmem [shape: f32[1,128], index: 6, kind: input, shape index: {}]
  %s7 = inlined_call_operand.vmem [shape: f32[256,128], index: 7, kind: output, shape index: {}]
  %s8 = sld [smem:[#allocation0]]
  $region61: #{_dqn_forward_impl.1} parent=0
    _
  %s10 = ssub.s32 1, %s8
  %s11 = scalar_select 0, %s10, %s8
  loop: start=0, step=1, limit=4
  $region2: #{_dqn_forward_impl.1} parent=0 // loop_pre_header
    _
  $region3: #{_dqn_forward_impl.1} parent=0 // loop_header
    %s13 = sphi 0, %s17
    %p14 = scmp.ge.s32.totalorder %s13, 4
    %s23 = sphi 0, %s25
    %s26 = sphi 0, %s23
    %s27 = sphi 0, %s26
    %s43 = sphi 0, %s27
    %s47 = sphi 0, %s47
    %s49 = sphi 0, %s47
    %s50 = sphi 0, %s49
    %s64 = sphi 0, %s50
    %s68 = sphi 0, %s68
    %s70 = sphi 0, %s68
    %s71 = sphi 0, %s70
    %s85 = sphi 0, %s71
    %s89 = sphi 0, %s89
    %s91 = sphi 0, %s89
    %s92 = sphi 0, %s91
    %s106 = sphi 0, %s92
    %s110 = sphi 0, %s110
    %s112 = sphi 0, %s110
    %s113 = sphi 0, %s112
    %s127 = sphi 0, %s113
    %s131 = sphi 0, %s131
    %s133 = sphi 0, %s131
    %s134 = sphi 0, %s133
    %s148 = sphi 0, %s134
    %s152 = sphi 0, %s152
    %s154 = sphi 0, %s152
    %s155 = sphi 0, %s154
    %s169 = sphi 0, %s155
    %s175 = sphi 0, %s177
    %s178 = sphi 0, %s175
    %s179 = sphi 0, %s178
    %s195 = sphi 0, %s179
  $region4: #{_dqn_forward_impl.1} parent=0 // loop_header_branch
    %16 = sbr.rel (%p14) target = $region8
  $region5: #{_dqn_forward_impl.1} parent=0 // loop_body
    %s18 = ssub.s32 %s13, 1
    %s19 = ssub.s32 %s13, 2
    %s20 = sadd.s32 %s13, 1
    %s21 = ssub.s32 %s13, %s20
    %p22 = scmp.eq.s32.totalorder %s21, 0
    %s24 = sadd.s32 %s23, 1
    %s25 = scalar_select %p22, %s23, %s24
    %p28 = pneg %p22
    %p29 = scmp.eq.s32.totalorder %s13, 1
    %p30 = por %p28, %p29
    %p31 = scmp.ne.s32.totalorder %s23, %s26
    %p32 = scmp.eq.s32.totalorder %s13, 0
    %p33 = por %p31, %p32
    %p34 = scmp.ne.s32.totalorder %s23, %s26
    %p35 = scmp.eq.s32.totalorder %s18, 1
    %p36 = por %p34, %p35
    %p37 = scmp.ne.s32.totalorder %s26, %s27
    %p38 = scmp.eq.s32.totalorder %s18, 0
    %p39 = por %p37, %p38
    %p40 = scmp.ne.s32.totalorder %s26, %s27
    %p41 = scmp.eq.s32.totalorder %s19, 1
    %p42 = por %p40, %p41
    %p44 = scmp.ne.s32.totalorder %s27, %s43
    %p45 = scmp.eq.s32.totalorder %s19, 0
    %p46 = por %p44, %p45
    %s48 = sadd.s32 %s47, 1
    %p51 = scmp.eq.s32.totalorder %s13, 1
    %p52 = scmp.ne.s32.totalorder %s47, %s49
    %p53 = scmp.eq.s32.totalorder %s13, 0
    %p54 = por %p52, %p53
    %p55 = scmp.ne.s32.totalorder %s47, %s49
    %p56 = scmp.eq.s32.totalorder %s18, 1
    %p57 = por %p55, %p56
    %p58 = scmp.ne.s32.totalorder %s49, %s50
    %p59 = scmp.eq.s32.totalorder %s18, 0
    %p60 = por %p58, %p59
    %p61 = scmp.ne.s32.totalorder %s49, %s50
    %p62 = scmp.eq.s32.totalorder %s19, 1
    %p63 = por %p61, %p62
    %p65 = scmp.ne.s32.totalorder %s50, %s64
    %p66 = scmp.eq.s32.totalorder %s19, 0
    %p67 = por %p65, %p66
    %s69 = sadd.s32 %s68, 1
    %p72 = scmp.eq.s32.totalorder %s13, 1
    %p73 = scmp.ne.s32.totalorder %s68, %s70
    %p74 = scmp.eq.s32.totalorder %s13, 0
    %p75 = por %p73, %p74
    %p76 = scmp.ne.s32.totalorder %s68, %s70
    %p77 = scmp.eq.s32.totalorder %s18, 1
    %p78 = por %p76, %p77
    %p79 = scmp.ne.s32.totalorder %s70, %s71
    %p80 = scmp.eq.s32.totalorder %s18, 0
    %p81 = por %p79, %p80
    %p82 = scmp.ne.s32.totalorder %s70, %s71
    %p83 = scmp.eq.s32.totalorder %s19, 1
    %p84 = por %p82, %p83
    %p86 = scmp.ne.s32.totalorder %s71, %s85
    %p87 = scmp.eq.s32.totalorder %s19, 0
    %p88 = por %p86, %p87
    %s90 = sadd.s32 %s89, 1
    %p93 = scmp.eq.s32.totalorder %s13, 1
    %p94 = scmp.ne.s32.totalorder %s89, %s91
    %p95 = scmp.eq.s32.totalorder %s13, 0
    %p96 = por %p94, %p95
    %p97 = scmp.ne.s32.totalorder %s89, %s91
    %p98 = scmp.eq.s32.totalorder %s18, 1
    %p99 = por %p97, %p98
    %p100 = scmp.ne.s32.totalorder %s91, %s92
    %p101 = scmp.eq.s32.totalorder %s18, 0
    %p102 = por %p100, %p101
    %p103 = scmp.ne.s32.totalorder %s91, %s92
    %p104 = scmp.eq.s32.totalorder %s19, 1
    %p105 = por %p103, %p104
    %p107 = scmp.ne.s32.totalorder %s92, %s106
    %p108 = scmp.eq.s32.totalorder %s19, 0
    %p109 = por %p107, %p108
    %s111 = sadd.s32 %s110, 1
    %p114 = scmp.eq.s32.totalorder %s13, 1
    %p115 = scmp.ne.s32.totalorder %s110, %s112
    %p116 = scmp.eq.s32.totalorder %s13, 0
    %p117 = por %p115, %p116
    %p118 = scmp.ne.s32.totalorder %s110, %s112
    %p119 = scmp.eq.s32.totalorder %s18, 1
    %p120 = por %p118, %p119
    %p121 = scmp.ne.s32.totalorder %s112, %s113
    %p122 = scmp.eq.s32.totalorder %s18, 0
    %p123 = por %p121, %p122
    %p124 = scmp.ne.s32.totalorder %s112, %s113
    %p125 = scmp.eq.s32.totalorder %s19, 1
    %p126 = por %p124, %p125
    %p128 = scmp.ne.s32.totalorder %s113, %s127
    %p129 = scmp.eq.s32.totalorder %s19, 0
    %p130 = por %p128, %p129
    %s132 = sadd.s32 %s131, 1
    %p135 = scmp.eq.s32.totalorder %s13, 1
    %p136 = scmp.ne.s32.totalorder %s131, %s133
    %p137 = scmp.eq.s32.totalorder %s13, 0
    %p138 = por %p136, %p137
    %p139 = scmp.ne.s32.totalorder %s131, %s133
    %p140 = scmp.eq.s32.totalorder %s18, 1
    %p141 = por %p139, %p140
    %p142 = scmp.ne.s32.totalorder %s133, %s134
    %p143 = scmp.eq.s32.totalorder %s18, 0
    %p144 = por %p142, %p143
    %p145 = scmp.ne.s32.totalorder %s133, %s134
    %p146 = scmp.eq.s32.totalorder %s19, 1
    %p147 = por %p145, %p146
    %p149 = scmp.ne.s32.totalorder %s134, %s148
    %p150 = scmp.eq.s32.totalorder %s19, 0
    %p151 = por %p149, %p150
    %s153 = sadd.s32 %s152, 1
    %p156 = scmp.eq.s32.totalorder %s13, 1
    %p157 = scmp.ne.s32.totalorder %s152, %s154
    %p158 = scmp.eq.s32.totalorder %s13, 0
    %p159 = por %p157, %p158
    %p160 = scmp.ne.s32.totalorder %s152, %s154
    %p161 = scmp.eq.s32.totalorder %s18, 1
    %p162 = por %p160, %p161
    %p163 = scmp.ne.s32.totalorder %s154, %s155
    %p164 = scmp.eq.s32.totalorder %s18, 0
    %p165 = por %p163, %p164
    %p166 = scmp.ne.s32.totalorder %s154, %s155
    %p167 = scmp.eq.s32.totalorder %s19, 1
    %p168 = por %p166, %p167
    %p170 = scmp.ne.s32.totalorder %s155, %s169
    %p171 = scmp.eq.s32.totalorder %s19, 0
    %p172 = por %p170, %p171
    %s173 = ssub.s32 %s13, %s20
    %p174 = scmp.eq.s32.totalorder %s173, 0
    %s176 = sadd.s32 %s175, 1
    %s177 = scalar_select %p174, %s175, %s176
    %p180 = pneg %p174
    %p181 = scmp.eq.s32.totalorder %s13, 1
    %p182 = por %p180, %p181
    %p183 = scmp.ne.s32.totalorder %s175, %s178
    %p184 = scmp.eq.s32.totalorder %s13, 0
    %p185 = por %p183, %p184
    %p186 = scmp.ne.s32.totalorder %s175, %s178
    %p187 = scmp.eq.s32.totalorder %s18, 1
    %p188 = por %p186, %p187
    %p189 = scmp.ne.s32.totalorder %s178, %s179
    %p190 = scmp.eq.s32.totalorder %s18, 0
    %p191 = por %p189, %p190
    %p192 = scmp.ne.s32.totalorder %s178, %s179
    %p193 = scmp.eq.s32.totalorder %s19, 1
    %p194 = por %p192, %p193
    %p196 = scmp.ne.s32.totalorder %s179, %s195
    %p197 = scmp.eq.s32.totalorder %s19, 0
    %p198 = por %p196, %p197
    %p199 = scmp.le.s32.totalorder 1, %s13
    %p200 = scmp.lt.s32.totalorder %s13, 3
    %p201 = pnand %p199, %p200
    %p202 = pneg %p201
    // Predicated region
    $region9: #{_dqn_forward_impl.1} parent=5 // pred_check
      _
    $region10: #{_dqn_forward_impl.1} parent=5 // pred_check_branch
      %204 = sbr.rel (%p201) target = $region12
    $region11: #{_dqn_forward_impl.1} parent=5 // pred_region
      %s205 = ssub.s32 %s13, 1
      // Predicated region
      $region13: #{_dqn_forward_impl.1} parent=11 // pred_check
        %p206 = pneg %p60
      $region14: #{_dqn_forward_impl.1} parent=11 // pred_check_branch
        %208 = sbr.rel (%p206) target = $region16
      $region15: #{_dqn_forward_impl.1} parent=11 // pred_region
        _
      $region16: #{_dqn_forward_impl.1} parent=11 // pred_fallthru
        _
      // Predicated region
      $region17: #{_dqn_forward_impl.1} parent=11 // pred_check
        %p209 = pneg %p81
      $region18: #{_dqn_forward_impl.1} parent=11 // pred_check_branch
        %211 = sbr.rel (%p209) target = $region20
      $region19: #{_dqn_forward_impl.1} parent=11 // pred_region
        _
      $region20: #{_dqn_forward_impl.1} parent=11 // pred_fallthru
        _
      // Predicated region
      $region21: #{_dqn_forward_impl.1} parent=11 // pred_check
        %p212 = pneg %p102
      $region22: #{_dqn_forward_impl.1} parent=11 // pred_check_branch
        %214 = sbr.rel (%p212) target = $region24
      $region23: #{_dqn_forward_impl.1} parent=11 // pred_region
        _
      $region24: #{_dqn_forward_impl.1} parent=11 // pred_fallthru
        _
      // Predicated region
      $region25: #{_dqn_forward_impl.1} parent=11 // pred_check
        %p215 = pneg %p123
      $region26: #{_dqn_forward_impl.1} parent=11 // pred_check_branch
        %217 = sbr.rel (%p215) target = $region28
      $region27: #{_dqn_forward_impl.1} parent=11 // pred_region
        _
      $region28: #{_dqn_forward_impl.1} parent=11 // pred_fallthru
        _
      // Predicated region
      $region29: #{_dqn_forward_impl.1} parent=11 // pred_check
        %p218 = pneg %p144
      $region30: #{_dqn_forward_impl.1} parent=11 // pred_check_branch
        %220 = sbr.rel (%p218) target = $region32
      $region31: #{_dqn_forward_impl.1} parent=11 // pred_region
        _
      $region32: #{_dqn_forward_impl.1} parent=11 // pred_fallthru
        _
      // Predicated region
      $region33: #{_dqn_forward_impl.1} parent=11 // pred_check
        %p221 = pneg %p165
      $region34: #{_dqn_forward_impl.1} parent=11 // pred_check_branch
        %223 = sbr.rel (%p221) target = $region36
      $region35: #{_dqn_forward_impl.1} parent=11 // pred_region
        _
      $region36: #{_dqn_forward_impl.1} parent=11 // pred_fallthru
        _
    $region12: #{_dqn_forward_impl.1} parent=5 // pred_fallthru
      _
    %p224 = scmp.lt.s32.totalorder %s13, 2
    // Predicated region
    $region37: #{_dqn_forward_impl.1} parent=5 // pred_check
      %p225 = pneg %p224
    $region38: #{_dqn_forward_impl.1} parent=5 // pred_check_branch
      %227 = sbr.rel (%p225) target = $region40
    $region39: #{_dqn_forward_impl.1} parent=5 // pred_region
      // Predicated region
      $region41: #{_dqn_forward_impl.1} parent=39 // pred_check
        %p228 = pneg %p33
      $region42: #{_dqn_forward_impl.1} parent=39 // pred_check_branch
        %230 = sbr.rel (%p228) target = $region44
      $region43: #{_dqn_forward_impl.1} parent=39 // pred_region
        %s231 = smul.u32 16, %s13
        %p232 = scmp.lt.s32.totalorder %s231, 31
        %s233 = scalar_select %p232, %s231, 31
        %s234 = smul.addr %s233, 8
        %s235 = scalar_lea.vmem %s0, %s234
        %s236 = smul.u32 16, %s13
      $region44: #{_dqn_forward_impl.1} parent=39 // pred_fallthru
        _
    $region40: #{_dqn_forward_impl.1} parent=5 // pred_fallthru
      _
    %p237 = scmp.le.s32.totalorder 1, %s13
    %p238 = scmp.lt.s32.totalorder %s13, 3
    %p239 = pnand %p237, %p238
    %p240 = pneg %p239
    // Predicated region
    $region45: #{_dqn_forward_impl.1} parent=5 // pred_check
      _
    $region46: #{_dqn_forward_impl.1} parent=5 // pred_check_branch
      %242 = sbr.rel (%p239) target = $region48
    $region47: #{_dqn_forward_impl.1} parent=5 // pred_region
      %s243 = ssub.s32 %s13, 1
      %s244 = smul.u32 16, %s18
      %p245 = scmp.lt.s32.totalorder %s244, 31
      %s246 = scalar_select %p245, %s244, 31
      %s247 = smul.addr %s246, 8
      %s248 = scalar_lea.vmem %s0, %s247
      %p249 = pneg %p39
      %p250 = pneg %p36
      %p251 = pneg %p60
      %p252 = pneg %p57
      %p253 = pneg %p81
      %p254 = pneg %p78
      %p255 = pneg %p102
      %p256 = pneg %p99
      %p257 = pneg %p123
      %p258 = pneg %p120
      %p259 = pneg %p144
      %p260 = pneg %p141
      %p261 = pneg %p165
      %p262 = pneg %p162
      %p263 = pneg %p191
      %p264 = pneg %p188
      %s265 = smul.u32 16, %s18
      %p266 = scmp.lt.s32.totalorder %s265, 31
      %s267 = scalar_select %p266, %s265, 31
      %s268 = smul.addr %s267, 8
      %s269 = scalar_lea.vmem %s7, %s268
      %s270 = smul.u32 16, %s18
      %p271 = scmp.lt.s32.totalorder %s270, 31
      %s272 = scalar_select %p271, %s270, 31
      %s273 = smul.addr %s272, 8
      %s274 = scalar_lea.vmem %s0, %s273
      %s275 = smul.u32 16, %s18
      %s276 = smul.u32 16, %s18
      %p277 = scmp.lt.s32.totalorder %s276, 31
      %s278 = scalar_select %p277, %s276, 31
      %s279 = smul.addr %s278, 8
      %s280 = scalar_lea.vmem %s7, %s279
      %s281 = smul.u32 16, %s18
      %v282 = vld [vmem:[%s274] sm:$0xff]
      %v283 = vld [vmem:[%s274 + $0x8] sm:$0xff]
      %v284 = vld [vmem:[%s274 + $0x10] sm:$0xff]
      %v285 = vld [vmem:[%s274 + $0x18] sm:$0xff]
      %v286 = vld [vmem:[%s274 + $0x20] sm:$0xff]
      %v287 = vld [vmem:[%s274 + $0x28] sm:$0xff]
      %v288 = vld [vmem:[%s274 + $0x30] sm:$0xff]
      %v289 = vld [vmem:[%s274 + $0x38] sm:$0xff]
      %v290 = vld [vmem:[%s274 + $0x40] sm:$0xff]
      %v291 = vld [vmem:[%s274 + $0x48] sm:$0xff]
      %v292 = vld [vmem:[%s274 + $0x50] sm:$0xff]
      %v293 = vld [vmem:[%s274 + $0x58] sm:$0xff]
      %v294 = vld [vmem:[%s274 + $0x60] sm:$0xff]
      %v295 = vld [vmem:[%s274 + $0x68] sm:$0xff]
      %v296 = vld [vmem:[%s274 + $0x70] sm:$0xff]
      %v297 = vld [vmem:[%s274 + $0x78] sm:$0xff]
      %v298 = vld [vmem:[%s1] sm:$0xff]
      %v299 = vld [vmem:[%s1 + $0x8] sm:$0xff]
      %v300 = vld [vmem:[%s1 + $0x10] sm:$0xff]
      %v301 = vld [vmem:[%s1 + $0x18] sm:$0xff]
      %v302 = vld [vmem:[%s1 + $0x20] sm:$0xff]
      %v303 = vld [vmem:[%s1 + $0x28] sm:$0xff]
      %v304 = vld [vmem:[%s1 + $0x30] sm:$0xff]
      %v305 = vld [vmem:[%s1 + $0x38] sm:$0xff]
      %v306 = vld [vmem:[%s1 + $0x40] sm:$0xff]
      %v307 = vld [vmem:[%s1 + $0x48] sm:$0xff]
      %v308 = vld [vmem:[%s1 + $0x50] sm:$0xff]
      %v309 = vld [vmem:[%s1 + $0x58] sm:$0xff]
      %v310 = vld [vmem:[%s1 + $0x60] sm:$0xff]
      %v311 = vld [vmem:[%s1 + $0x68] sm:$0xff]
      %v312 = vld [vmem:[%s1 + $0x70] sm:$0xff]
      %v313 = vld [vmem:[%s1 + $0x78] sm:$0xff]
      %v314 = vld [vmem:[%s2] sm:$0x1]
      %v316 = vlaneseq
      %v317 = vshrl.u32 %v316, 7
      %v318 = vsub.s32 0, %v317
      %v319 = vrot.slane %v314, %v318
      %321 = vmatprep.subr.mxu0 0.0
      %322 = vmatpush1.msra.mxu0 %v313
      %323 = vmatprep.subr.mxu0 0.0
      %324 = vmatpush1.msra.mxu0 %v312
      %325 = vmatprep.subr.mxu0 0.0
      %326 = vmatpush1.msra.mxu0 %v311
      %327 = vmatprep.subr.mxu0 0.0
      %328 = vmatpush1.msra.mxu0 %v310
      %329 = vmatprep.subr.mxu0 0.0
      %330 = vmatpush1.msra.mxu0 %v309
      %331 = vmatprep.subr.mxu0 0.0
      %332 = vmatpush1.msra.mxu0 %v308
      %333 = vmatprep.subr.mxu0 0.0
      %334 = vmatpush1.msra.mxu0 %v307
      %335 = vmatprep.subr.mxu0 0.0
      %336 = vmatpush1.msra.mxu0 %v306
      %337 = vmatprep.subr.mxu0 0.0
      %338 = vmatpush1.msra.mxu0 %v305
      %339 = vmatprep.subr.mxu0 0.0
      %340 = vmatpush1.msra.mxu0 %v304
      %341 = vmatprep.subr.mxu0 0.0
      %342 = vmatpush1.msra.mxu0 %v303
      %343 = vmatprep.subr.mxu0 0.0
      %344 = vmatpush1.msra.mxu0 %v302
      %345 = vmatprep.subr.mxu0 0.0
      %346 = vmatpush1.msra.mxu0 %v301
      %347 = vmatprep.subr.mxu0 0.0
      %348 = vmatpush1.msra.mxu0 %v300
      %349 = vmatprep.subr.mxu0 0.0
      %350 = vmatpush1.msra.mxu0 %v299
      %351 = vmatprep.subr.mxu0 0.0
      %352 = vmatpush1.msra.mxu0 %v298
      %353 = vmatprep.subr.mxu0 0.0
      %354 = vmatpush2.msra.mxu0 0.0
      %355 = vmatprep.subr.mxu0 0.0
      %356 = vmatpush2.msra.mxu0 0.0
      %357 = vmatprep.subr.mxu0 0.0
      %358 = vmatpush2.msra.mxu0 0.0
      %359 = vmatprep.subr.mxu0 0.0
      %360 = vmatpush2.msra.mxu0 0.0
      %361 = vmatprep.subr.mxu0 0.0
      %362 = vmatpush2.msra.mxu0 0.0
      %363 = vmatprep.subr.mxu0 0.0
      %364 = vmatpush2.msra.mxu0 0.0
      %365 = vmatprep.subr.mxu0 0.0
      %366 = vmatpush2.msra.mxu0 0.0
      %367 = vmatprep.subr.mxu0 0.0
      %368 = vmatpush2.msra.mxu0 0.0
      %369 = vmatprep.subr.mxu0 0.0
      %370 = vmatpush2.msra.mxu0 0.0
      %371 = vmatprep.subr.mxu0 0.0
      %372 = vmatpush2.msra.mxu0 0.0
      %373 = vmatprep.subr.mxu0 0.0
      %374 = vmatpush2.msra.mxu0 0.0
      %375 = vmatprep.subr.mxu0 0.0
      %376 = vmatpush2.msra.mxu0 0.0
      %377 = vmatprep.subr.mxu0 0.0
      %378 = vmatpush2.msra.mxu0 0.0
      %379 = vmatprep.subr.mxu0 0.0
      %380 = vmatpush2.msra.mxu0 0.0
      %381 = vmatprep.subr.mxu0 0.0
      %382 = vmatpush2.msra.mxu0 0.0
      %383 = vmatprep.subr.mxu0 0.0
      %384 = vmatpush2.msra.mxu0 0.0
      %385 = vmatprep.mubr.f32.mxu0 0.0
      %386 = vmatmul.mubr.f32.gmra.mxu0 %v282
      %v387 = vpop.f32.mrf.mxu0
      %v388 = vadd.f32 %v319, %v387
      %v389 = vpop.f32.mrf.mxu0
      %390 = vmatprep.mubr.f32.mxu0 0.0
      %391 = vmatmul.mubr.f32.gmra.mxu0 %v283
      %v392 = vpop.f32.mrf.mxu0
      %v393 = vadd.f32 %v319, %v392
      %v394 = vpop.f32.mrf.mxu0
      %395 = vmatprep.mubr.f32.mxu0 0.0
      %396 = vmatmul.mubr.f32.gmra.mxu0 %v284
      %v397 = vpop.f32.mrf.mxu0
      %v398 = vadd.f32 %v319, %v397
      %v399 = vpop.f32.mrf.mxu0
      %400 = vmatprep.mubr.f32.mxu0 0.0
      %401 = vmatmul.mubr.f32.gmra.mxu0 %v285
      %v402 = vpop.f32.mrf.mxu0
      %v403 = vadd.f32 %v319, %v402
      %v404 = vpop.f32.mrf.mxu0
      %405 = vmatprep.mubr.f32.mxu0 0.0
      %406 = vmatmul.mubr.f32.gmra.mxu0 %v286
      %v407 = vpop.f32.mrf.mxu0
      %v408 = vadd.f32 %v319, %v407
      %v409 = vpop.f32.mrf.mxu0
      %410 = vmatprep.mubr.f32.mxu0 0.0
      %411 = vmatmul.mubr.f32.gmra.mxu0 %v287
      %v412 = vpop.f32.mrf.mxu0
      %v413 = vadd.f32 %v319, %v412
      %v414 = vpop.f32.mrf.mxu0
      %415 = vmatprep.mubr.f32.mxu0 0.0
      %416 = vmatmul.mubr.f32.gmra.mxu0 %v288
      %v417 = vpop.f32.mrf.mxu0
      %v418 = vadd.f32 %v319, %v417
      %v419 = vpop.f32.mrf.mxu0
      %420 = vmatprep.mubr.f32.mxu0 0.0
      %421 = vmatmul.mubr.f32.gmra.mxu0 %v289
      %v422 = vpop.f32.mrf.mxu0
      %v423 = vadd.f32 %v319, %v422
      %v424 = vpop.f32.mrf.mxu0
      %425 = vmatprep.mubr.f32.mxu0 0.0
      %426 = vmatmul.mubr.f32.gmra.mxu0 %v290
      %v427 = vpop.f32.mrf.mxu0
      %v428 = vadd.f32 %v319, %v427
      %v429 = vpop.f32.mrf.mxu0
      %430 = vmatprep.mubr.f32.mxu0 0.0
      %431 = vmatmul.mubr.f32.gmra.mxu0 %v291
      %v432 = vpop.f32.mrf.mxu0
      %v433 = vadd.f32 %v319, %v432
      %v434 = vpop.f32.mrf.mxu0
      %435 = vmatprep.mubr.f32.mxu0 0.0
      %436 = vmatmul.mubr.f32.gmra.mxu0 %v292
      %v437 = vpop.f32.mrf.mxu0
      %v438 = vadd.f32 %v319, %v437
      %v439 = vpop.f32.mrf.mxu0
      %440 = vmatprep.mubr.f32.mxu0 0.0
      %441 = vmatmul.mubr.f32.gmra.mxu0 %v293
      %v442 = vpop.f32.mrf.mxu0
      %v443 = vadd.f32 %v319, %v442
      %v444 = vpop.f32.mrf.mxu0
      %445 = vmatprep.mubr.f32.mxu0 0.0
      %446 = vmatmul.mubr.f32.gmra.mxu0 %v294
      %v447 = vpop.f32.mrf.mxu0
      %v448 = vadd.f32 %v319, %v447
      %v449 = vpop.f32.mrf.mxu0
      %450 = vmatprep.mubr.f32.mxu0 0.0
      %451 = vmatmul.mubr.f32.gmra.mxu0 %v295
      %v452 = vpop.f32.mrf.mxu0
      %v453 = vadd.f32 %v319, %v452
      %v454 = vpop.f32.mrf.mxu0
      %455 = vmatprep.mubr.f32.mxu0 0.0
      %456 = vmatmul.mubr.f32.gmra.mxu0 %v296
      %v457 = vpop.f32.mrf.mxu0
      %v458 = vadd.f32 %v319, %v457
      %v459 = vpop.f32.mrf.mxu0
      %460 = vmatprep.mubr.f32.mxu0 0.0
      %461 = vmatmul.mubr.f32.gmra.mxu0 %v297
      %v462 = vpop.f32.mrf.mxu0
      %v463 = vadd.f32 %v319, %v462
      %v464 = vpop.f32.mrf.mxu0
      %465 = vdwg.mxu0
      %v466 = vmax.f32 %v388, 0.0
      %v467 = vmax.f32 %v393, 0.0
      %v468 = vmax.f32 %v398, 0.0
      %v469 = vmax.f32 %v403, 0.0
      %v470 = vmax.f32 %v408, 0.0
      %v471 = vmax.f32 %v413, 0.0
      %v472 = vmax.f32 %v418, 0.0
      %v473 = vmax.f32 %v423, 0.0
      %v474 = vmax.f32 %v428, 0.0
      %v475 = vmax.f32 %v433, 0.0
      %v476 = vmax.f32 %v438, 0.0
      %v477 = vmax.f32 %v443, 0.0
      %v478 = vmax.f32 %v448, 0.0
      %v479 = vmax.f32 %v453, 0.0
      %v480 = vmax.f32 %v458, 0.0
      %v481 = vmax.f32 %v463, 0.0
      %v482 = vld [vmem:[%s3] sm:$0xff]
      %v483 = vld [vmem:[%s3 + $0x8] sm:$0xff]
      %v484 = vld [vmem:[%s3 + $0x10] sm:$0xff]
      %v485 = vld [vmem:[%s3 + $0x18] sm:$0xff]
      %v486 = vld [vmem:[%s3 + $0x20] sm:$0xff]
      %v487 = vld [vmem:[%s3 + $0x28] sm:$0xff]
      %v488 = vld [vmem:[%s3 + $0x30] sm:$0xff]
      %v489 = vld [vmem:[%s3 + $0x38] sm:$0xff]
      %v490 = vld [vmem:[%s3 + $0x40] sm:$0xff]
      %v491 = vld [vmem:[%s3 + $0x48] sm:$0xff]
      %v492 = vld [vmem:[%s3 + $0x50] sm:$0xff]
      %v493 = vld [vmem:[%s3 + $0x58] sm:$0xff]
      %v494 = vld [vmem:[%s3 + $0x60] sm:$0xff]
      %v495 = vld [vmem:[%s3 + $0x68] sm:$0xff]
      %v496 = vld [vmem:[%s3 + $0x70] sm:$0xff]
      %v497 = vld [vmem:[%s3 + $0x78] sm:$0xff]
      %v498 = vld [vmem:[%s4] sm:$0x1]
      %v500 = vlaneseq
      %v501 = vshrl.u32 %v500, 7
      %v502 = vsub.s32 0, %v501
      %v503 = vrot.slane %v498, %v502
      %505 = vmatprep.subr.mxu0 0.0
      %506 = vmatpush1.msra.mxu0 %v497
      %507 = vmatprep.subr.mxu0 0.0
      %508 = vmatpush1.msra.mxu0 %v496
      %509 = vmatprep.subr.mxu0 0.0
      %510 = vmatpush1.msra.mxu0 %v495
      %511 = vmatprep.subr.mxu0 0.0
      %512 = vmatpush1.msra.mxu0 %v494
      %513 = vmatprep.subr.mxu0 0.0
      %514 = vmatpush1.msra.mxu0 %v493
      %515 = vmatprep.subr.mxu0 0.0
      %516 = vmatpush1.msra.mxu0 %v492
      %517 = vmatprep.subr.mxu0 0.0
      %518 = vmatpush1.msra.mxu0 %v491
      %519 = vmatprep.subr.mxu0 0.0
      %520 = vmatpush1.msra.mxu0 %v490
      %521 = vmatprep.subr.mxu0 0.0
      %522 = vmatpush1.msra.mxu0 %v489
      %523 = vmatprep.subr.mxu0 0.0
      %524 = vmatpush1.msra.mxu0 %v488
      %525 = vmatprep.subr.mxu0 0.0
      %526 = vmatpush1.msra.mxu0 %v487
      %527 = vmatprep.subr.mxu0 0.0
      %528 = vmatpush1.msra.mxu0 %v486
      %529 = vmatprep.subr.mxu0 0.0
      %530 = vmatpush1.msra.mxu0 %v485
      %531 = vmatprep.subr.mxu0 0.0
      %532 = vmatpush1.msra.mxu0 %v484
      %533 = vmatprep.subr.mxu0 0.0
      %534 = vmatpush1.msra.mxu0 %v483
      %535 = vmatprep.subr.mxu0 0.0
      %536 = vmatpush1.msra.mxu0 %v482
      %537 = vmatprep.subr.mxu0 0.0
      %538 = vmatpush2.msra.mxu0 0.0
      %539 = vmatprep.subr.mxu0 0.0
      %540 = vmatpush2.msra.mxu0 0.0
      %541 = vmatprep.subr.mxu0 0.0
      %542 = vmatpush2.msra.mxu0 0.0
      %543 = vmatprep.subr.mxu0 0.0
      %544 = vmatpush2.msra.mxu0 0.0
      %545 = vmatprep.subr.mxu0 0.0
      %546 = vmatpush2.msra.mxu0 0.0
      %547 = vmatprep.subr.mxu0 0.0
      %548 = vmatpush2.msra.mxu0 0.0
      %549 = vmatprep.subr.mxu0 0.0
      %550 = vmatpush2.msra.mxu0 0.0
      %551 = vmatprep.subr.mxu0 0.0
      %552 = vmatpush2.msra.mxu0 0.0
      %553 = vmatprep.subr.mxu0 0.0
      %554 = vmatpush2.msra.mxu0 0.0
      %555 = vmatprep.subr.mxu0 0.0
      %556 = vmatpush2.msra.mxu0 0.0
      %557 = vmatprep.subr.mxu0 0.0
      %558 = vmatpush2.msra.mxu0 0.0
      %559 = vmatprep.subr.mxu0 0.0
      %560 = vmatpush2.msra.mxu0 0.0
      %561 = vmatprep.subr.mxu0 0.0
      %562 = vmatpush2.msra.mxu0 0.0
      %563 = vmatprep.subr.mxu0 0.0
      %564 = vmatpush2.msra.mxu0 0.0
      %565 = vmatprep.subr.mxu0 0.0
      %566 = vmatpush2.msra.mxu0 0.0
      %567 = vmatprep.subr.mxu0 0.0
      %568 = vmatpush2.msra.mxu0 0.0
      %569 = vmatprep.mubr.f32.mxu0 0.0
      %570 = vmatmul.mubr.f32.gmra.mxu0 %v466
      %v571 = vpop.f32.mrf.mxu0
      %v572 = vadd.f32 %v503, %v571
      %v573 = vpop.f32.mrf.mxu0
      %574 = vmatprep.mubr.f32.mxu0 0.0
      %575 = vmatmul.mubr.f32.gmra.mxu0 %v467
      %v576 = vpop.f32.mrf.mxu0
      %v577 = vadd.f32 %v503, %v576
      %v578 = vpop.f32.mrf.mxu0
      %579 = vmatprep.mubr.f32.mxu0 0.0
      %580 = vmatmul.mubr.f32.gmra.mxu0 %v468
      %v581 = vpop.f32.mrf.mxu0
      %v582 = vadd.f32 %v503, %v581
      %v583 = vpop.f32.mrf.mxu0
      %584 = vmatprep.mubr.f32.mxu0 0.0
      %585 = vmatmul.mubr.f32.gmra.mxu0 %v469
      %v586 = vpop.f32.mrf.mxu0
      %v587 = vadd.f32 %v503, %v586
      %v588 = vpop.f32.mrf.mxu0
      %589 = vmatprep.mubr.f32.mxu0 0.0
      %590 = vmatmul.mubr.f32.gmra.mxu0 %v470
      %v591 = vpop.f32.mrf.mxu0
      %v592 = vadd.f32 %v503, %v591
      %v593 = vpop.f32.mrf.mxu0
      %594 = vmatprep.mubr.f32.mxu0 0.0
      %595 = vmatmul.mubr.f32.gmra.mxu0 %v471
      %v596 = vpop.f32.mrf.mxu0
      %v597 = vadd.f32 %v503, %v596
      %v598 = vpop.f32.mrf.mxu0
      %599 = vmatprep.mubr.f32.mxu0 0.0
      %600 = vmatmul.mubr.f32.gmra.mxu0 %v472
      %v601 = vpop.f32.mrf.mxu0
      %v602 = vadd.f32 %v503, %v601
      %v603 = vpop.f32.mrf.mxu0
      %604 = vmatprep.mubr.f32.mxu0 0.0
      %605 = vmatmul.mubr.f32.gmra.mxu0 %v473
      %v606 = vpop.f32.mrf.mxu0
      %v607 = vadd.f32 %v503, %v606
      %v608 = vpop.f32.mrf.mxu0
      %609 = vmatprep.mubr.f32.mxu0 0.0
      %610 = vmatmul.mubr.f32.gmra.mxu0 %v474
      %v611 = vpop.f32.mrf.mxu0
      %v612 = vadd.f32 %v503, %v611
      %v613 = vpop.f32.mrf.mxu0
      %614 = vmatprep.mubr.f32.mxu0 0.0
      %615 = vmatmul.mubr.f32.gmra.mxu0 %v475
      %v616 = vpop.f32.mrf.mxu0
      %v617 = vadd.f32 %v503, %v616
      %v618 = vpop.f32.mrf.mxu0
      %619 = vmatprep.mubr.f32.mxu0 0.0
      %620 = vmatmul.mubr.f32.gmra.mxu0 %v476
      %v621 = vpop.f32.mrf.mxu0
      %v622 = vadd.f32 %v503, %v621
      %v623 = vpop.f32.mrf.mxu0
      %624 = vmatprep.mubr.f32.mxu0 0.0
      %625 = vmatmul.mubr.f32.gmra.mxu0 %v477
      %v626 = vpop.f32.mrf.mxu0
      %v627 = vadd.f32 %v503, %v626
      %v628 = vpop.f32.mrf.mxu0
      %629 = vmatprep.mubr.f32.mxu0 0.0
      %630 = vmatmul.mubr.f32.gmra.mxu0 %v478
      %v631 = vpop.f32.mrf.mxu0
      %v632 = vadd.f32 %v503, %v631
      %v633 = vpop.f32.mrf.mxu0
      %634 = vmatprep.mubr.f32.mxu0 0.0
      %635 = vmatmul.mubr.f32.gmra.mxu0 %v479
      %v636 = vpop.f32.mrf.mxu0
      %v637 = vadd.f32 %v503, %v636
      %v638 = vpop.f32.mrf.mxu0
      %639 = vmatprep.mubr.f32.mxu0 0.0
      %640 = vmatmul.mubr.f32.gmra.mxu0 %v480
      %v641 = vpop.f32.mrf.mxu0
      %v642 = vadd.f32 %v503, %v641
      %v643 = vpop.f32.mrf.mxu0
      %644 = vmatprep.mubr.f32.mxu0 0.0
      %645 = vmatmul.mubr.f32.gmra.mxu0 %v481
      %v646 = vpop.f32.mrf.mxu0
      %v647 = vadd.f32 %v503, %v646
      %v648 = vpop.f32.mrf.mxu0
      %649 = vdwg.mxu0
      %v650 = vmax.f32 %v572, 0.0
      %v651 = vmax.f32 %v577, 0.0
      %v652 = vmax.f32 %v582, 0.0
      %v653 = vmax.f32 %v587, 0.0
      %v654 = vmax.f32 %v592, 0.0
      %v655 = vmax.f32 %v597, 0.0
      %v656 = vmax.f32 %v602, 0.0
      %v657 = vmax.f32 %v607, 0.0
      %v658 = vmax.f32 %v612, 0.0
      %v659 = vmax.f32 %v617, 0.0
      %v660 = vmax.f32 %v622, 0.0
      %v661 = vmax.f32 %v627, 0.0
      %v662 = vmax.f32 %v632, 0.0
      %v663 = vmax.f32 %v637, 0.0
      %v664 = vmax.f32 %v642, 0.0
      %v665 = vmax.f32 %v647, 0.0
      %v666 = vld [vmem:[%s5] sm:$0xff]
      %v667 = vld [vmem:[%s5 + $0x8] sm:$0xff]
      %v668 = vld [vmem:[%s5 + $0x10] sm:$0xff]
      %v669 = vld [vmem:[%s5 + $0x18] sm:$0xff]
      %v670 = vld [vmem:[%s5 + $0x20] sm:$0xff]
      %v671 = vld [vmem:[%s5 + $0x28] sm:$0xff]
      %v672 = vld [vmem:[%s5 + $0x30] sm:$0xff]
      %v673 = vld [vmem:[%s5 + $0x38] sm:$0xff]
      %v674 = vld [vmem:[%s5 + $0x40] sm:$0xff]
      %v675 = vld [vmem:[%s5 + $0x48] sm:$0xff]
      %v676 = vld [vmem:[%s5 + $0x50] sm:$0xff]
      %v677 = vld [vmem:[%s5 + $0x58] sm:$0xff]
      %v678 = vld [vmem:[%s5 + $0x60] sm:$0xff]
      %v679 = vld [vmem:[%s5 + $0x68] sm:$0xff]
      %v680 = vld [vmem:[%s5 + $0x70] sm:$0xff]
      %v681 = vld [vmem:[%s5 + $0x78] sm:$0xff]
      %v682 = vld [vmem:[%s6] sm:$0x1]
      %v684 = vlaneseq
      %v685 = vshrl.u32 %v684, 7
      %v686 = vsub.s32 0, %v685
      %v687 = vrot.slane %v682, %v686
      %689 = vmatprep.subr.mxu0 0.0
      %690 = vmatpush1.msra.mxu0 %v681
      %691 = vmatprep.subr.mxu0 0.0
      %692 = vmatpush1.msra.mxu0 %v680
      %693 = vmatprep.subr.mxu0 0.0
      %694 = vmatpush1.msra.mxu0 %v679
      %695 = vmatprep.subr.mxu0 0.0
      %696 = vmatpush1.msra.mxu0 %v678
      %697 = vmatprep.subr.mxu0 0.0
      %698 = vmatpush1.msra.mxu0 %v677
      %699 = vmatprep.subr.mxu0 0.0
      %700 = vmatpush1.msra.mxu0 %v676
      %701 = vmatprep.subr.mxu0 0.0
      %702 = vmatpush1.msra.mxu0 %v675
      %703 = vmatprep.subr.mxu0 0.0
      %704 = vmatpush1.msra.mxu0 %v674
      %705 = vmatprep.subr.mxu0 0.0
      %706 = vmatpush1.msra.mxu0 %v673
      %707 = vmatprep.subr.mxu0 0.0
      %708 = vmatpush1.msra.mxu0 %v672
      %709 = vmatprep.subr.mxu0 0.0
      %710 = vmatpush1.msra.mxu0 %v671
      %711 = vmatprep.subr.mxu0 0.0
      %712 = vmatpush1.msra.mxu0 %v670
      %713 = vmatprep.subr.mxu0 0.0
      %714 = vmatpush1.msra.mxu0 %v669
      %715 = vmatprep.subr.mxu0 0.0
      %716 = vmatpush1.msra.mxu0 %v668
      %717 = vmatprep.subr.mxu0 0.0
      %718 = vmatpush1.msra.mxu0 %v667
      %719 = vmatprep.subr.mxu0 0.0
      %720 = vmatpush1.msra.mxu0 %v666
      %721 = vmatprep.subr.mxu0 0.0
      %722 = vmatpush2.msra.mxu0 0.0
      %723 = vmatprep.subr.mxu0 0.0
      %724 = vmatpush2.msra.mxu0 0.0
      %725 = vmatprep.subr.mxu0 0.0
      %726 = vmatpush2.msra.mxu0 0.0
      %727 = vmatprep.subr.mxu0 0.0
      %728 = vmatpush2.msra.mxu0 0.0
      %729 = vmatprep.subr.mxu0 0.0
      %730 = vmatpush2.msra.mxu0 0.0
      %731 = vmatprep.subr.mxu0 0.0
      %732 = vmatpush2.msra.mxu0 0.0
      %733 = vmatprep.subr.mxu0 0.0
      %734 = vmatpush2.msra.mxu0 0.0
      %735 = vmatprep.subr.mxu0 0.0
      %736 = vmatpush2.msra.mxu0 0.0
      %737 = vmatprep.subr.mxu0 0.0
      %738 = vmatpush2.msra.mxu0 0.0
      %739 = vmatprep.subr.mxu0 0.0
      %740 = vmatpush2.msra.mxu0 0.0
      %741 = vmatprep.subr.mxu0 0.0
      %742 = vmatpush2.msra.mxu0 0.0
      %743 = vmatprep.subr.mxu0 0.0
      %744 = vmatpush2.msra.mxu0 0.0
      %745 = vmatprep.subr.mxu0 0.0
      %746 = vmatpush2.msra.mxu0 0.0
      %747 = vmatprep.subr.mxu0 0.0
      %748 = vmatpush2.msra.mxu0 0.0
      %749 = vmatprep.subr.mxu0 0.0
      %750 = vmatpush2.msra.mxu0 0.0
      %751 = vmatprep.subr.mxu0 0.0
      %752 = vmatpush2.msra.mxu0 0.0
      %753 = vmatprep.mubr.f32.mxu0 0.0
      %754 = vmatmul.mubr.f32.gmra.mxu0 %v650
      %v755 = vpop.f32.mrf.mxu0
      %v756 = vadd.f32 %v687, %v755
      %v757 = vpop.f32.mrf.mxu0
      %758 = vmatprep.mubr.f32.mxu0 0.0
      %759 = vmatmul.mubr.f32.gmra.mxu0 %v651
      %v760 = vpop.f32.mrf.mxu0
      %v761 = vadd.f32 %v687, %v760
      %v762 = vpop.f32.mrf.mxu0
      %763 = vmatprep.mubr.f32.mxu0 0.0
      %764 = vmatmul.mubr.f32.gmra.mxu0 %v652
      %v765 = vpop.f32.mrf.mxu0
      %v766 = vadd.f32 %v687, %v765
      %v767 = vpop.f32.mrf.mxu0
      %768 = vmatprep.mubr.f32.mxu0 0.0
      %769 = vmatmul.mubr.f32.gmra.mxu0 %v653
      %v770 = vpop.f32.mrf.mxu0
      %v771 = vadd.f32 %v687, %v770
      %v772 = vpop.f32.mrf.mxu0
      %773 = vmatprep.mubr.f32.mxu0 0.0
      %774 = vmatmul.mubr.f32.gmra.mxu0 %v654
      %v775 = vpop.f32.mrf.mxu0
      %v776 = vadd.f32 %v687, %v775
      %v777 = vpop.f32.mrf.mxu0
      %778 = vmatprep.mubr.f32.mxu0 0.0
      %779 = vmatmul.mubr.f32.gmra.mxu0 %v655
      %v780 = vpop.f32.mrf.mxu0
      %v781 = vadd.f32 %v687, %v780
      %v782 = vpop.f32.mrf.mxu0
      %783 = vmatprep.mubr.f32.mxu0 0.0
      %784 = vmatmul.mubr.f32.gmra.mxu0 %v656
      %v785 = vpop.f32.mrf.mxu0
      %v786 = vadd.f32 %v687, %v785
      %v787 = vpop.f32.mrf.mxu0
      %788 = vmatprep.mubr.f32.mxu0 0.0
      %789 = vmatmul.mubr.f32.gmra.mxu0 %v657
      %v790 = vpop.f32.mrf.mxu0
      %v791 = vadd.f32 %v687, %v790
      %v792 = vpop.f32.mrf.mxu0
      %793 = vmatprep.mubr.f32.mxu0 0.0
      %794 = vmatmul.mubr.f32.gmra.mxu0 %v658
      %v795 = vpop.f32.mrf.mxu0
      %v796 = vadd.f32 %v687, %v795
      %v797 = vpop.f32.mrf.mxu0
      %798 = vmatprep.mubr.f32.mxu0 0.0
      %799 = vmatmul.mubr.f32.gmra.mxu0 %v659
      %v800 = vpop.f32.mrf.mxu0
      %v801 = vadd.f32 %v687, %v800
      %v802 = vpop.f32.mrf.mxu0
      %803 = vmatprep.mubr.f32.mxu0 0.0
      %804 = vmatmul.mubr.f32.gmra.mxu0 %v660
      %v805 = vpop.f32.mrf.mxu0
      %v806 = vadd.f32 %v687, %v805
      %v807 = vpop.f32.mrf.mxu0
      %808 = vmatprep.mubr.f32.mxu0 0.0
      %809 = vmatmul.mubr.f32.gmra.mxu0 %v661
      %v810 = vpop.f32.mrf.mxu0
      %v811 = vadd.f32 %v687, %v810
      %v812 = vpop.f32.mrf.mxu0
      %813 = vmatprep.mubr.f32.mxu0 0.0
      %814 = vmatmul.mubr.f32.gmra.mxu0 %v662
      %v815 = vpop.f32.mrf.mxu0
      %v816 = vadd.f32 %v687, %v815
      %v817 = vpop.f32.mrf.mxu0
      %818 = vmatprep.mubr.f32.mxu0 0.0
      %819 = vmatmul.mubr.f32.gmra.mxu0 %v663
      %v820 = vpop.f32.mrf.mxu0
      %v821 = vadd.f32 %v687, %v820
      %v822 = vpop.f32.mrf.mxu0
      %823 = vmatprep.mubr.f32.mxu0 0.0
      %824 = vmatmul.mubr.f32.gmra.mxu0 %v664
      %v825 = vpop.f32.mrf.mxu0
      %v826 = vadd.f32 %v687, %v825
      %v827 = vpop.f32.mrf.mxu0
      %828 = vmatprep.mubr.f32.mxu0 0.0
      %829 = vmatmul.mubr.f32.gmra.mxu0 %v665
      %v830 = vpop.f32.mrf.mxu0
      %v831 = vadd.f32 %v687, %v830
      %v832 = vpop.f32.mrf.mxu0
      %833 = vdwg.mxu0
      %834 = vst [vmem:[%s280] sm:$0xff] %v756
      %835 = vst [vmem:[%s280 + $0x8] sm:$0xff] %v761
      %836 = vst [vmem:[%s280 + $0x10] sm:$0xff] %v766
      %837 = vst [vmem:[%s280 + $0x18] sm:$0xff] %v771
      %838 = vst [vmem:[%s280 + $0x20] sm:$0xff] %v776
      %839 = vst [vmem:[%s280 + $0x28] sm:$0xff] %v781
      %840 = vst [vmem:[%s280 + $0x30] sm:$0xff] %v786
      %841 = vst [vmem:[%s280 + $0x38] sm:$0xff] %v791
      %842 = vst [vmem:[%s280 + $0x40] sm:$0xff] %v796
      %843 = vst [vmem:[%s280 + $0x48] sm:$0xff] %v801
      %844 = vst [vmem:[%s280 + $0x50] sm:$0xff] %v806
      %845 = vst [vmem:[%s280 + $0x58] sm:$0xff] %v811
      %846 = vst [vmem:[%s280 + $0x60] sm:$0xff] %v816
      %847 = vst [vmem:[%s280 + $0x68] sm:$0xff] %v821
      %848 = vst [vmem:[%s280 + $0x70] sm:$0xff] %v826
      %849 = vst [vmem:[%s280 + $0x78] sm:$0xff] %v831
      %s850 = smul.u32 16, %s18
      %p851 = scmp.lt.s32.totalorder %s850, 31
      %s852 = scalar_select %p851, %s850, 31
      %s853 = smul.addr %s852, 8
      %s854 = scalar_lea.vmem %s7, %s853
      // Predicated region
      $region49: #{_dqn_forward_impl.1} parent=47 // pred_check
        %p855 = pneg %p188
      $region50: #{_dqn_forward_impl.1} parent=47 // pred_check_branch
        %857 = sbr.rel (%p855) target = $region52
      $region51: #{_dqn_forward_impl.1} parent=47 // pred_region
        %s858 = smul.u32 16, %s18
      $region52: #{_dqn_forward_impl.1} parent=47 // pred_fallthru
        _
    $region48: #{_dqn_forward_impl.1} parent=5 // pred_fallthru
      _
    %p859 = scmp.le.s32.totalorder 2, %s13
    // Predicated region
    $region53: #{_dqn_forward_impl.1} parent=5 // pred_check
      %p860 = pneg %p859
    $region54: #{_dqn_forward_impl.1} parent=5 // pred_check_branch
      %862 = sbr.rel (%p860) target = $region56
    $region55: #{_dqn_forward_impl.1} parent=5 // pred_region
      %s863 = ssub.s32 %s13, 2
      // Predicated region
      $region57: #{_dqn_forward_impl.1} parent=55 // pred_check
        %p864 = pneg %p194
      $region58: #{_dqn_forward_impl.1} parent=55 // pred_check_branch
        %866 = sbr.rel (%p864) target = $region60
      $region59: #{_dqn_forward_impl.1} parent=55 // pred_region
        %s867 = smul.u32 16, %s19
        %p868 = scmp.lt.s32.totalorder %s867, 31
        %s869 = scalar_select %p868, %s867, 31
        %s870 = smul.addr %s869, 8
        %s871 = scalar_lea.vmem %s7, %s870
      $region60: #{_dqn_forward_impl.1} parent=55 // pred_fallthru
        _
    $region56: #{_dqn_forward_impl.1} parent=5 // pred_fallthru
      _
  $region6: #{_dqn_forward_impl.1} parent=0 // loop_footer
    %s17 = sadd.s32 1, %s13
  $region7: #{_dqn_forward_impl.1} parent=0 // loop_footer_branch
    %12 = sbr.rel target = $region3
  $region8: #{_dqn_forward_impl.1} parent=0 // loop_exit
    _

</llo_original>
